<compile_context>
chip_gen: v7x
topology: tpu7x:2x2x1
jax: 0.10.0
libtpu: 0.0.40
codegen_flags: <defaults>
</compile_context>

<pallas_src>
import jax
import jax.numpy as jnp
from jax import lax
from jax.experimental import pallas as pl
from jax.experimental.pallas import tpu as pltpu

EPS = 1e-5


def _miny_bn_kernel(x_ref, g_ref, b_ref, o_ref):
    # x_ref: (N, 2, C_blk, HW)   g_ref/b_ref: (C_blk, 1)   o_ref: (N, C_blk, HW)
    # Elementwise min of the two channel halves, read directly off the ref views.
    y = jnp.minimum(x_ref[:, 0], x_ref[:, 1])                     # (N, C_blk, HW) f32

    # Single-pass BatchNorm statistics over (N, H*W) per channel.
    inv_n = 1.0 / float(y.shape[0] * y.shape[2])
    s1 = jnp.sum(y, axis=(0, 2), keepdims=True)                   # (1, C_blk, 1)
    s2 = jnp.sum(y * y, axis=(0, 2), keepdims=True)               # (1, C_blk, 1)
    mean = s1 * inv_n
    var = jnp.maximum(s2 * inv_n - mean * mean, 0.0)              # biased var (PyTorch BN); clamp cancellation

    scale = lax.rsqrt(var + EPS) * g_ref[...][None]               # gamma * inv_std   (1, C_blk, 1)
    shift = b_ref[...][None] - mean * scale                       # beta - mean*scale (1, C_blk, 1)
    o_ref[...] = (y * scale + shift).astype(o_ref.dtype)          # single FMA per element in the store path


def _vmem_capacity_bytes():
    """Physical VMEM of the local chip; conservative (v7x-sized) fallback if unavailable."""
    try:
        return int(pltpu.get_tpu_info().vmem_capacity_bytes)
    except Exception:
        return 64 << 20


def _is_multicore_chip():
    """True on chips with >1 TensorCore per chip that benefit from CORE_PARALLEL (v7x)."""
    try:
        return "7" in jax.devices()[0].device_kind.lower()
    except Exception:
        return False


def _pick_c_blk(N, C, HW, vmem_budget, itemsize=4, min_steps=4):
    """Largest channel block that divides C, satisfies the (8,*) block constraint, keeps the
    double-buffered working set (+ in-kernel temporaries) within budget, and — when C allows —
    leaves at least `min_steps` grid steps so the pipeline can hide DMA head/tail."""
    if C <= 8:
        return C                                     # full-extent block is always legal
    per_chan = N * HW * itemsize
    # 2 input halves + 1 output (double-buffered by BlockSpec) + ~1 full-block temp in the body.
    bytes_per_cblk = per_chan * (2 * (2 + 1) + 1)
    cap_vmem = max(vmem_budget // max(bytes_per_cblk, 1), 1)
    cap_steps = max(C // min_steps, 1)               # guarantee >= min_steps steps when possible
    cap = min(cap_vmem, cap_steps, C)
    start = max(8, (cap // 8) * 8)
    for blk in range(start, 7, -8):                  # multiples of 8 that divide C
        if C % blk == 0:
            return blk
    # Awkward C (no multiple-of-8 divisor under the cap): fall back to full extent.
    # TODO(synk): replace with a two-pass / split-reduction path for graceful degradation.
    return C


def miny_forward(x, gamma, beta):
    """x: (N, 2*C, H, W) float32. gamma, beta: (C,) float32. Returns (N, C*H*W) float32."""
    N, C2, H, W = x.shape
    assert C2 % 2 == 0
    C = C2 // 2
    HW = H * W

    # Free, contiguous reshapes in the wrapper: lane-dense last dim, single blocked operand.
    x4 = x.reshape(N, 2, C, HW)
    g2 = gamma.reshape(C, 1)
    b2 = beta.reshape(C, 1)

    # Generation-aware VMEM sizing (v5e/v6e: 128 MiB, v7x: 64 MiB physical).
    vmem_cap = _vmem_capacity_bytes()
    vmem_limit = int(min(vmem_cap * 3 // 5, 96 << 20))       # ~76 MiB on 128 MiB chips, ~38 MiB on v7x
    budget = int(min(vmem_cap * 35 // 100, 48 << 20))        # ~44 MiB / ~22 MiB working-set budget

    c_blk = _pick_c_blk(N, C, HW, vmem_budget=budget)
    n_steps = C // c_blk
    grid = (n_steps,)

    # Channels are fully independent: CORE_PARALLEL on multi-core chips (v7x) so both
    # TensorCores stream; plain "parallel" elsewhere.
    if _is_multicore_chip() and n_steps >= 2:
        dim_sem = (getattr(pltpu, "CORE_PARALLEL", "parallel"),)
    else:
        dim_sem = ("parallel",)

    grid_spec = pltpu.PrefetchScalarGridSpec(
        num_scalar_prefetch=0,
        grid=grid,
        in_specs=[
            pl.BlockSpec((N, 2, c_blk, HW), lambda c: (0, 0, c, 0)),  # both halves, one DMA per step
            pl.BlockSpec((c_blk, 1), lambda c: (c, 0)),               # gamma slice
            pl.BlockSpec((c_blk, 1), lambda c: (c, 0)),               # beta slice
        ],
        out_specs=pl.BlockSpec((N, c_blk, HW), lambda c: (0, c, 0)),
    )

    y = pl.pallas_call(
        _miny_bn_kernel,
        out_shape=jax.ShapeDtypeStruct((N, C, HW), jnp.float32),
        grid_spec=grid_spec,
        compiler_params=pltpu.CompilerParams(
            dimension_semantics=dim_sem,
            vmem_limit_bytes=vmem_limit,
        ),
    )(x4, g2, b2)

    return y.reshape(N, -1)


def _reference(x, gamma, beta):
    N, C2, H, W = x.shape
    C = C2 // 2
    y = jnp.minimum(x[:, :C], x[:, C:])
    mean = jnp.mean(y, axis=(0, 2, 3), keepdims=True)
    var = jnp.mean((y - mean) ** 2, axis=(0, 2, 3), keepdims=True)
    yn = (y - mean) / jnp.sqrt(var + EPS)
    yn = yn * gamma[None, :, None, None] + beta[None, :, None, None]
    return yn.reshape(N, -1)


if __name__ == "__main__":
    # Small shapes: batch=2, channel_in=4 (so x has 2*4=8 channels), spatial=16x16 (H*W=256 lanes)
    N, C, H, W = 2, 4, 16, 16
    key = jax.random.PRNGKey(0)
    x = jax.random.normal(key, (N, 2 * C, H, W), dtype=jnp.float32)

    # Deterministic BN affine parameters (synthetic, not checkpoint-loaded)
    gamma = 1.0 + 0.1 * jnp.arange(C, dtype=jnp.float32)
    beta = 0.05 * jnp.arange(C, dtype=jnp.float32) - 0.1

    out = miny_forward(x, gamma, beta)
    out = jax.block_until_ready(out)

    ref = _reference(x, gamma, beta)
    assert out.shape == (N, C * H * W), out.shape
    assert jnp.allclose(out, ref, atol=1e-5, rtol=1e-5), float(jnp.max(jnp.abs(out - ref)))

    print("KERNEL_OK")
</pallas_src>

<mosaic_0001>
module attributes {stable_mosaic.version = 11 : i64} {
  func.func @_miny_bn_kernel(%arg0: i32, %arg1: memref<2x2x4x256xf32, #tpu.memory_space<vmem>>, %arg2: memref<4x1xf32, #tpu.memory_space<vmem>>, %arg3: memref<4x1xf32, #tpu.memory_space<vmem>>, %arg4: memref<2x4x256xf32, #tpu.memory_space<vmem>>) attributes {dimension_semantics = [#tpu.dimension_semantics<parallel>], iteration_bounds = array<i64: 1>, scalar_prefetch = 0 : i64, scratch_operands = 0 : i64, tpu.core_type = #tpu.core_type<tc>, window_params = [{transform_indices = @transform_0, window_bounds = array<i64: 2, 2, 4, 256>}, {transform_indices = @transform_1, window_bounds = array<i64: 4, 1>}, {transform_indices = @transform_2, window_bounds = array<i64: 4, 1>}, {transform_indices = @transform_3, window_bounds = array<i64: 2, 4, 256>}]} {
    %c0 = arith.constant 0 : index
    %c0_0 = arith.constant 0 : index
    %c0_1 = arith.constant 0 : index
    %c0_2 = arith.constant 0 : index
    %0 = vector.load %arg1[%c0, %c0_0, %c0_1, %c0_2] : memref<2x2x4x256xf32, #tpu.memory_space<vmem>>, vector<2x1x4x256xf32>
    %1 = vector.shape_cast %0 : vector<2x1x4x256xf32> to vector<2x4x256xf32>
    %c0_3 = arith.constant 0 : index
    %c1 = arith.constant 1 : index
    %c0_4 = arith.constant 0 : index
    %c0_5 = arith.constant 0 : index
    %2 = vector.load %arg1[%c0_3, %c1, %c0_4, %c0_5] : memref<2x2x4x256xf32, #tpu.memory_space<vmem>>, vector<2x1x4x256xf32>
    %3 = vector.shape_cast %2 : vector<2x1x4x256xf32> to vector<2x4x256xf32>
    %4 = arith.minimumf %1, %3 : vector<2x4x256xf32>
    %cst = arith.constant dense<0.000000e+00> : vector<4xf32>
    %5 = vector.multi_reduction <add>, %4, %cst [0, 2] : vector<2x4x256xf32> to vector<4xf32>
    %6 = vector.shape_cast %5 : vector<4xf32> to vector<1x4x1xf32>
    %7 = arith.mulf %4, %4 : vector<2x4x256xf32>
    %cst_6 = arith.constant dense<0.000000e+00> : vector<4xf32>
    %8 = vector.multi_reduction <add>, %7, %cst_6 [0, 2] : vector<2x4x256xf32> to vector<4xf32>
    %9 = vector.shape_cast %8 : vector<4xf32> to vector<1x4x1xf32>
    %cst_7 = arith.constant 0.001953125 : f32
    %10 = vector.broadcast %cst_7 : f32 to vector<1x4x1xf32>
    %11 = arith.mulf %6, %10 : vector<1x4x1xf32>
    %cst_8 = arith.constant 0.001953125 : f32
    %12 = vector.broadcast %cst_8 : f32 to vector<1x4x1xf32>
    %13 = arith.mulf %9, %12 : vector<1x4x1xf32>
    %14 = arith.mulf %11, %11 : vector<1x4x1xf32>
    %15 = arith.subf %13, %14 : vector<1x4x1xf32>
    %cst_9 = arith.constant 0.000000e+00 : f32
    %16 = vector.broadcast %cst_9 : f32 to vector<1x4x1xf32>
    %17 = arith.maximumf %15, %16 : vector<1x4x1xf32>
    %cst_10 = arith.constant 9.99999974E-6 : f32
    %18 = vector.broadcast %cst_10 : f32 to vector<1x4x1xf32>
    %19 = arith.addf %17, %18 : vector<1x4x1xf32>
    %20 = math.rsqrt %19 : vector<1x4x1xf32>
    %c0_11 = arith.constant 0 : index
    %c0_12 = arith.constant 0 : index
    %21 = vector.load %arg2[%c0_11, %c0_12] : memref<4x1xf32, #tpu.memory_space<vmem>>, vector<4x1xf32>
    %22 = vector.shape_cast %21 : vector<4x1xf32> to vector<1x4x1xf32>
    %23 = arith.mulf %20, %22 : vector<1x4x1xf32>
    %c0_13 = arith.constant 0 : index
    %c0_14 = arith.constant 0 : index
    %24 = vector.load %arg3[%c0_13, %c0_14] : memref<4x1xf32, #tpu.memory_space<vmem>>, vector<4x1xf32>
    %25 = vector.shape_cast %24 : vector<4x1xf32> to vector<1x4x1xf32>
    %26 = arith.mulf %11, %23 : vector<1x4x1xf32>
    %27 = arith.subf %25, %26 : vector<1x4x1xf32>
    %28 = vector.broadcast %23 : vector<1x4x1xf32> to vector<2x4x256xf32>
    %29 = arith.mulf %4, %28 : vector<2x4x256xf32>
    %30 = vector.broadcast %27 : vector<1x4x1xf32> to vector<2x4x256xf32>
    %31 = arith.addf %29, %30 : vector<2x4x256xf32>
    %c0_15 = arith.constant 0 : index
    %c0_16 = arith.constant 0 : index
    %c0_17 = arith.constant 0 : index
    %32 = vector.load %arg4[%c0_15, %c0_16, %c0_17] : memref<2x4x256xf32, #tpu.memory_space<vmem>>, vector<2x4x256xf32>
    tpu.vector_store %arg4[%c0_15, %c0_16, %c0_17], %31 {strides = array<i32>} : memref<2x4x256xf32, #tpu.memory_space<vmem>>, vector<2x4x256xf32>,
    return
  }
  func.func @transform_0(%arg0: i32) -> (i32, i32, i32, i32) {
    %c0_i32 = arith.constant 0 : i32
    %c0_i32_0 = arith.constant 0 : i32
    %c0_i32_1 = arith.constant 0 : i32
    %c0_i32_2 = arith.constant 0 : i32
    return %c0_i32, %c0_i32_0, %arg0, %c0_i32_1 : i32, i32, i32, i32
  }
  func.func @transform_1(%arg0: i32) -> (i32, i32) {
    %c0_i32 = arith.constant 0 : i32
    %c0_i32_0 = arith.constant 0 : i32
    return %arg0, %c0_i32 : i32, i32
  }
  func.func @transform_2(%arg0: i32) -> (i32, i32) {
    %c0_i32 = arith.constant 0 : i32
    %c0_i32_0 = arith.constant 0 : i32
    return %arg0, %c0_i32 : i32, i32
  }
  func.func @transform_3(%arg0: i32) -> (i32, i32, i32) {
    %c0_i32 = arith.constant 0 : i32
    %c0_i32_0 = arith.constant 0 : i32
    %c0_i32_1 = arith.constant 0 : i32
    return %c0_i32, %arg0, %c0_i32_0 : i32, i32, i32
  }
}

</mosaic_0001>

<llo_original>
// kernel: tpu_custom_call.1
$region0: #{tpu_custom_call.1}
  #allocation0 [shape = 'u32[]', space=smem, size = 0x4, offset = 0x4, fixed_abs, tag = 'smem constant byte address 0x4 - core index']
  #allocation1 [shape = 'u32[144,128]{1,0:T(1,128)}', space=vmem, size = 0x12000, scoped, tag = 'internal scratch']
  %s0 = inlined_call_operand.hbm [shape: f32[2,2,4,256], index: 0, kind: input, shape index: {}]
  %s1 = inlined_call_operand.vmem [shape: f32[4,1], index: 1, kind: input, shape index: {}]
  %s2 = inlined_call_operand.vmem [shape: f32[4,1], index: 2, kind: input, shape index: {}]
  %s3 = inlined_call_operand.hbm [shape: f32[2,4,256], index: 3, kind: output, shape index: {}]
  %s4 = sld [smem:[#allocation0]]
  $region26: #{tpu_custom_call.1} parent=0
    _
  %s6 = ssub.s32 1, %s4
  %s7 = scalar_select 0, %s6, %s4
  $region1: #{tpu_custom_call.1} parent=0
    #allocation2 [shape = 'u8[16384]{0}', space=vmem, size = 0x4000, scoped, tag = 'input window, operand 0, single buffered']
    #allocation3 [shape = 's32[1]{0}', space=sflag, size = 0x4, scoped, tag = 'scoped memory for tpu_custom_call.1']
    #allocation4 [shape = 's32[1]{0}', space=sflag, size = 0x4, scoped, tag = 'scoped memory for tpu_custom_call.1']
    #allocation5 [shape = 'u8[8192]{0}', space=vmem, size = 0x2000, scoped, tag = 'output window, operand 0, single buffered']
    %8 = vsyncpa [#allocation3], 0
    %9 = vsyncpa [#allocation4], 0
    // Predicated region
    $region2: #{tpu_custom_call.1} parent=1 // pred_check
      _
    $region3: #{tpu_custom_call.1} parent=1 // pred_check_branch
      %11 = sbr.rel (0) target = $region5
    $region4: #{tpu_custom_call.1} parent=1 // pred_region
      %s13 = ssub.s32 512, 512
      %14 = vsyncadd [#allocation3], %s13
      %s15 = sshll.u32 [#allocation2], 4
      %s16 = int_to_ptr.vmem [resolvable:$true] %s15
      %21 = dma.hbm_to_vmem [thread:$0]  %s0, 512, %s16, [#allocation3], 128, 128, 8
    $region5: #{tpu_custom_call.1} parent=1 // pred_fallthru
      _
    // Predicated region
    $region6: #{tpu_custom_call.1} parent=1 // pred_check
      _
    $region7: #{tpu_custom_call.1} parent=1 // pred_check_branch
      %23 = sbr.rel (0) target = $region9
    $region8: #{tpu_custom_call.1} parent=1 // pred_region
      _
    $region9: #{tpu_custom_call.1} parent=1 // pred_fallthru
      _
    // Predicated region
    $region10: #{tpu_custom_call.1} parent=1 // pred_check
      _
    $region11: #{tpu_custom_call.1} parent=1 // pred_check_branch
      %25 = sbr.rel (0) target = $region13
    $region12: #{tpu_custom_call.1} parent=1 // pred_region
      _
    $region13: #{tpu_custom_call.1} parent=1 // pred_fallthru
      _
    // Predicated region
    $region14: #{tpu_custom_call.1} parent=1 // pred_check
      _
    $region15: #{tpu_custom_call.1} parent=1 // pred_check_branch
      %27 = sbr.rel (0) target = $region17
    $region16: #{tpu_custom_call.1} parent=1 // pred_region
      %28 = dma.done [#allocation3], 512
    $region17: #{tpu_custom_call.1} parent=1 // pred_fallthru
      _
    %v29 = vld [vmem:[#allocation2] sm:$0xff]
    %v30 = vld [vmem:[#allocation2 + $0x10] sm:$0xff]
    %s31 = scalar_lea.vmem [#allocation2], 8
    %v32 = vld [vmem:[%s31] sm:$0xff]
    %v33 = vld [vmem:[%s31 + $0x10] sm:$0xff]
    %v34 = vmin.f32 %v29, %v32
    %v35 = vmin.f32 %v30, %v33
    %v38 = vcombine.high %v34, %v34
    %v39 = vcombine.high %v35, %v35
    %vm42 = vcmask 1043456
    %v43 = vsel %vm42, %v34, 0.0
    %v44 = vsel %vm42, %v38, 0.0
    %v45 = vadd.f32 %v43, %v44
    %v46 = vsel %vm42, %v35, 0.0
    %v47 = vadd.f32 %v45, %v46
    %v48 = vsel %vm42, %v39, 0.0
    %v49 = vadd.f32 %v47, %v48
    %50 = vadd.xlane.f32.xlu0 %v49
    %v51 = vpop.xlane.xlu0 %50
    %v52 = vmul.f32 %v34, %v34
    %v53 = vmul.f32 %v35, %v35
    %v56 = vcombine.high %v52, %v52
    %v57 = vcombine.high %v53, %v53
    %v60 = vsel %vm42, %v52, 0.0
    %v61 = vsel %vm42, %v56, 0.0
    %v62 = vadd.f32 %v60, %v61
    %v63 = vsel %vm42, %v53, 0.0
    %v64 = vadd.f32 %v62, %v63
    %v65 = vsel %vm42, %v57, 0.0
    %v66 = vadd.f32 %v64, %v65
    %67 = vadd.xlane.f32.xlu0 %v66
    %v68 = vpop.xlane.xlu0 %67
    %v69 = vmul.f32 %v51, 0.001953125
    %v70 = vmul.f32 %v68, 0.001953125
    %v71 = vmul.f32 %v69, %v69
    %v72 = vsub.f32 %v70, %v71
    %v73 = vmax.f32 %v72, 0.0
    %v74 = vadd.f32 %v73, 1e-05
    %v75 = vrsqrt.pop %v74
    %v76 = vld [vmem:[%s1] sm:$0xf]
    %v77 = vmul.f32 %v75, %v76
    %v78 = vld [vmem:[%s2] sm:$0xf]
    %v79 = vmul.f32 %v69, %v77
    %v80 = vsub.f32 %v78, %v79
    %82 = vset.pattern.permute.xlu0 0
    %83 = vperm.xlu0 %82, %v77
    %v84 = vpop.permute.xlu0 %83
    %v86 = vunpack.c.l.s4 839922192
    %v87 = vunpack.c.0.s8 %v86
    %v88 = vlaneseq
    %v89 = vshrl.u32 %v88, 7
    %v90 = vsub.s32 %v87, %v89
    %v91 = vrot.slane %v84, %v90
    %v93 = vmul.f32 %v34, %v91
    %v94 = vmul.f32 %v35, %v91
    %96 = vset.pattern.permute.xlu0 0
    %97 = vperm.xlu0 %96, %v80
    %v98 = vpop.permute.xlu0 %97
    %v100 = vunpack.c.l.s4 839922192
    %v101 = vunpack.c.0.s8 %v100
    %v102 = vlaneseq
    %v103 = vshrl.u32 %v102, 7
    %v104 = vsub.s32 %v101, %v103
    %v105 = vrot.slane %v98, %v104
    %v107 = vadd.f32 %v93, %v105
    %v108 = vadd.f32 %v94, %v105
    %109 = vst [vmem:[#allocation5] sm:$0xff] %v107
    %110 = vst [vmem:[#allocation5 + $0x8] sm:$0xff] %v108
    // Predicated region
    $region18: #{tpu_custom_call.1} parent=1 // pred_check
      _
    $region19: #{tpu_custom_call.1} parent=1 // pred_check_branch
      %112 = sbr.rel (0) target = $region21
    $region20: #{tpu_custom_call.1} parent=1 // pred_region
      %s114 = ssub.s32 256, 256
      %115 = vsyncadd [#allocation4], %s114
      %s116 = sshll.u32 [#allocation5], 4
      %s117 = int_to_ptr.vmem [resolvable:$true] %s116
      %122 = dma.vmem_to_hbm [thread:$0]  %s117, 256, %s3, [#allocation4], 128, 128, 8
    $region21: #{tpu_custom_call.1} parent=1 // pred_fallthru
      _
    // Predicated region
    $region22: #{tpu_custom_call.1} parent=1 // pred_check
      _
    $region23: #{tpu_custom_call.1} parent=1 // pred_check_branch
      %124 = sbr.rel (0) target = $region25
    $region24: #{tpu_custom_call.1} parent=1 // pred_region
      %125 = dma.done [#allocation4], 256
    $region25: #{tpu_custom_call.1} parent=1 // pred_fallthru
      _
    %126 = vsyncpa [#allocation3], 1
    %127 = vsyncpa [#allocation4], 1

</llo_original>
